<compile_context>
chip_gen: v7x
topology: tpu7x:2x2x1
jax: 0.10.0
libtpu: 0.0.40
codegen_flags: <defaults>
</compile_context>

<pallas_src>
import functools

import jax
import jax.numpy as jnp
from jax.experimental import pallas as pl
from jax.experimental.pallas import tpu as pltpu


def _round_up(x, m):
    return (x + m - 1) // m * m


def icarl_bic_kernel(x_ref, w1_ref, b1_ref, w2_ref, b2_ref, o_ref, acc_ref, *, TB, T):
    """Grid = (batch tiles ['parallel'], CHW contraction tiles ['arbitrary']).

    One (i, k) step: accumulate a partial of matmul-1 into the f32 scratch; on the last
    contraction step do bias+ReLU, segment consensus (strided sublane reads, no MXU),
    and the classifier matmul with the BiasLayer correction folded into (w2, b2).
    """
    k = pl.program_id(1)

    @pl.when(k == 0)
    def _():
        acc_ref[...] = jnp.zeros_like(acc_ref)

    # matmul-1 partial contraction: bf16 MXU inputs, f32 accumulate.
    acc_ref[...] += jnp.dot(x_ref[...], w1_ref[...],
                            preferred_element_type=jnp.float32)        # (TB*T, Dp) f32

    @pl.when(k == pl.num_programs(1) - 1)
    def _():
        # feature bias + ReLU in f32 (kept off bf16 VALU for v5e), written back in place.
        acc_ref[...] = jnp.maximum(acc_ref[...] + b1_ref[...], 0.0)

        # segment consensus (mean over T) BEFORE the classifier (exact linear rewrite):
        # rows are ordered b*T + t, so segment t of every batch item is a stride-T
        # sublane slice -> T-1 VPU adds, no MXU weight push, no extra DMA'd input.
        s = acc_ref[pl.ds(0, TB, stride=T), :]
        for t in range(1, T):
            s = s + acc_ref[pl.ds(t, TB, stride=T), :]
        fmean = s * (1.0 / T)                                          # (TB, Dp) f32

        # classifier FC with the BiasLayer correction folded in (bf16 MXU, f32 out).
        o_ref[...] = jnp.dot(fmean.astype(jnp.bfloat16), w2_ref[...],
                             preferred_element_type=jnp.float32) + b2_ref[...]


def icarl_bic_forward(x_nchw, kernel_params, *, num_segments, num_class,
                      block_batch=None, block_k=512):
    """x_nchw: (B, T*C, H, W) float32 -- PyTorch NCHW TSN-style input."""
    B, TC, H, W = x_nchw.shape
    T = num_segments
    C = TC // T
    HW = H * W
    CHW = C * HW

    w1s, b1p, w2f, b2f = kernel_params
    CHWp = w1s.shape[0]
    Dp = w1s.shape[1]
    Kp = w2f.shape[1]

    # ---- per-generation VMEM capacity (flat 32 MiB cap removed) -------------------------
    try:
        info = pltpu.get_tpu_info()
        vmem_cap = int(getattr(info, "vmem_capacity_bytes", 64 * 1024 * 1024))
    except Exception:
        vmem_cap = 64 * 1024 * 1024            # conservative: v7x per-core size

    # ---- contraction tile over padded CHW (multiple of 128 dividing CHWp) ---------------
    bk = max(128, (min(block_k, CHWp) // 128) * 128)
    while CHWp % bk != 0:
        bk -= 128
    num_k = CHWp // bk

    # ---- batch tile: saturate the MXU M-dim, stay inside a VMEM budget ------------------
    if block_batch is None:
        TB = max(1, 256 // T)                  # target >= 256 rows per matmul-1 tile
        if (B // 2) * T >= 256:
            TB = min(TB, B // 2)               # keep >= 2 grid steps (v7x: 2 TensorCores)
    else:
        TB = block_batch
    TB = max(1, min(TB, B))
    # clamp so x tile (bf16, double-buffered) + f32 accumulator fit in ~half of VMEM.
    per_row = 2 * (bk * 2) + Dp * 4
    max_rows = max(8, (vmem_cap // 2) // per_row)
    TB = max(1, min(TB, max_rows // max(T, 1)))
    # prefer a TB dividing B so the host-side padding copy of x is skipped entirely.
    if B % TB != 0:
        d = TB
        while d > 1 and B % d != 0:
            d -= 1
        if d * 2 >= TB:
            TB = d
    num_blocks = pl.cdiv(B, TB)
    Bp = num_blocks * TB

    # ---- layout glue: (B, T*C, H, W) -> (num_blocks, TB*T, CHWp) bf16 -------------------
    # (B, T*C, H, W) is row-major contiguous as ((b,t),(c,h,w)) -> free reshape.
    x = x_nchw.reshape(B * T, CHW).astype(jnp.bfloat16)
    if CHWp != CHW:
        x = jnp.pad(x, ((0, 0), (0, CHWp - CHW)))
    if Bp != B:
        x = jnp.pad(x, ((0, (Bp - B) * T), (0, 0)))
    x = x.reshape(num_blocks, TB * T, CHWp)

    # ---- VMEM limit: actual buffer sum with headroom, capped below physical -------------
    buf_bytes = (TB * T * bk * 2 * 2                 # x tile, bf16, double-buffered
                 + bk * Dp * 2 * (2 if num_k > 1 else 1)   # w1 tile(s), bf16
                 + Dp * 4 + Dp * Kp * 2 + Kp * 4     # b1, w2, b2 (single-buffered)
                 + TB * Kp * 4 * 2                   # out tile, double-buffered
                 + TB * T * Dp * 4)                  # f32 accumulator scratch
    vmem_limit = min(int(vmem_cap * 0.85), max(4 * buf_bytes, 32 * 1024 * 1024))

    kernel = functools.partial(icarl_bic_kernel, TB=TB, T=T)

    out = pl.pallas_call(
        kernel,
        out_shape=jax.ShapeDtypeStruct((num_blocks, TB, Kp), jnp.float32),
        grid=(num_blocks, num_k),
        in_specs=[
            # x tile: pipelined over batch and contraction axes.
            pl.BlockSpec((None, TB * T, bk), lambda i, k: (i, 0, k)),
            # w1 (pooling folded in): streamed over the contraction axis; single-buffered
            # when there is only one contraction tile (grid-invariant then).
            pl.BlockSpec((bk, Dp), lambda i, k: (k, 0),
                         pipeline_mode=pl.Buffered(2 if num_k > 1 else 1)),
            # grid-invariant operands: no double buffering (halves their VMEM residency).
            pl.BlockSpec((1, Dp), lambda i, k: (0, 0), pipeline_mode=pl.Buffered(1)),
            pl.BlockSpec((Dp, Kp), lambda i, k: (0, 0), pipeline_mode=pl.Buffered(1)),
            pl.BlockSpec((1, Kp), lambda i, k: (0, 0), pipeline_mode=pl.Buffered(1)),
        ],
        out_specs=pl.BlockSpec((None, TB, Kp), lambda i, k: (i, 0, 0)),
        scratch_shapes=[pltpu.VMEM((TB * T, Dp), jnp.float32)],
        compiler_params=pltpu.CompilerParams(
            dimension_semantics=("parallel", "arbitrary"),
            vmem_limit_bytes=vmem_limit,
        ),
    )(x, w1s, b1p, w2f, b2f)

    # strip batch padding and class-dim padding (glue).
    return out.reshape(Bp, Kp)[:B, :num_class]


def make_module_params(key, *, C, D, K, list_splits, n_known):
    """Raw parameters mirroring the PyTorch module (head weights + BiasLayers)."""
    k1, k2, k3, k4, k5, k6 = jax.random.split(key, 6)
    w1 = jax.random.normal(k1, (C, D), jnp.float32) * 0.1
    b1 = jax.random.normal(k2, (D,), jnp.float32) * 0.01
    w2 = jax.random.normal(k3, (D, K), jnp.float32) * 0.1
    b2 = jax.random.normal(k4, (K,), jnp.float32) * 0.01

    n_layers = len(list_splits)
    if n_known > 0:
        # "trained" BiasLayer values (PyTorch init is alpha=1, beta=0) so the
        # bias-correction path is actually exercised by the numeric check.
        alphas = 1.0 + 0.1 * jax.random.normal(k5, (n_layers,), jnp.float32)
        betas = 0.05 * jax.random.normal(k6, (n_layers,), jnp.float32)
    else:
        # n_known == 0: PyTorch forward skips the BiasLayers -> identity correction.
        alphas = jnp.ones((n_layers,), jnp.float32)
        betas = jnp.zeros((n_layers,), jnp.float32)

    # expand per-split scalars into per-class vectors (slice -> BiasLayer -> concat).
    alpha_cols, beta_cols = [], []
    init_val = 0
    for i, val_lim in enumerate(list_splits):
        width = val_lim - init_val
        alpha_cols.append(jnp.full((width,), alphas[i], jnp.float32))
        beta_cols.append(jnp.full((width,), betas[i], jnp.float32))
        init_val = val_lim
    alpha_vec = jnp.concatenate(alpha_cols)
    beta_vec = jnp.concatenate(beta_cols)
    return dict(w1=w1, b1=b1, w2=w2, b2=b2, alpha_vec=alpha_vec, beta_vec=beta_vec)


def prepare_kernel_params(raw, *, HW, lane=128):
    """Fold pooling + BiasLayer into the weights; pad to lane/MXU shapes; cast MXU operands bf16."""
    w1, b1, w2, b2 = raw["w1"], raw["b1"], raw["w2"], raw["b2"]
    alpha_vec, beta_vec = raw["alpha_vec"], raw["beta_vec"]
    C, D = w1.shape
    K = w2.shape[1]
    CHW = C * HW
    CHWp = _round_up(CHW, lane)
    Dp = _round_up(D, lane)
    Kp = _round_up(K, lane)

    # fold spatial mean:  x_flat[(c*HW + s)] @ (w1[c] / HW)  ==  mean_s(x) @ w1
    # TODO(synk): at real frame sizes the HW-fold inflates w1 bytes/FLOPs ~HWx; the kernel
    # already streams w1s over the CHW contraction grid axis, but for very large H*W move
    # the spatial pooling in-kernel (lane reduce) instead of folding it into w1.
    w1s = jnp.repeat(w1, HW, axis=0) / float(HW)                        # (CHW, D)
    w1s = jnp.pad(w1s, ((0, CHWp - CHW), (0, Dp - D))).astype(jnp.bfloat16)
    b1p = jnp.pad(b1, (0, Dp - D)).reshape(1, Dp).astype(jnp.float32)

    # fold BiasLayer:  alpha*(f @ w2 + b2) + beta  ==  f @ (w2*alpha) + (alpha*b2 + beta)
    w2f = jnp.pad(w2 * alpha_vec[None, :], ((0, Dp - D), (0, Kp - K))).astype(jnp.bfloat16)
    b2f = jnp.pad(alpha_vec * b2 + beta_vec, (0, Kp - K)).reshape(1, Kp).astype(jnp.float32)
    return (w1s, b1p, w2f, b2f)


def reference_forward(x_nchw, raw, *, num_segments, n_known):
    """Pure-JAX f32 reference in the ORIGINAL (unfused) order: pool -> FC+ReLU ->
    classifier -> consensus -> BiasLayer. Verifies that all kernel-side fusions
    (pool-into-w1, consensus-before-classifier, bias folding) are exact."""
    B, TC, H, W = x_nchw.shape
    T = num_segments
    C = TC // T
    x = x_nchw.reshape(B, T, C, H * W).astype(jnp.float32)
    pooled = jnp.mean(x, axis=-1)                                           # (B, T, C)
    feat = jnp.maximum(jnp.einsum("btc,cd->btd", pooled, raw["w1"]) + raw["b1"], 0.0)
    logits = jnp.einsum("btd,dk->btk", feat, raw["w2"]) + raw["b2"]         # (B, T, K)
    consensus = jnp.mean(logits, axis=1)                                    # (B, K)
    if n_known > 0:
        return raw["alpha_vec"] * consensus + raw["beta_vec"]
    return consensus


if __name__ == "__main__":
    # Small TSN-consistent shapes: batch=4, num_segments=4, RGB (C=3), 16x16 frames,
    # feature dim 32, num_class=8 with class splits [4, 8]; n_known > 0 exercises the
    # BiasLayer path. block_batch=2 gives a real 2-step batch grid, and CHW=768 with the
    # default block_k gives 2 contraction steps, exercising the accumulator path.
    B, T, C, H, W = 4, 4, 3, 16, 16
    D, K = 32, 8
    n_known = 4
    list_splits = [4, 8]

    key = jax.random.PRNGKey(0)
    kx, kp = jax.random.split(key)
    x = jax.random.normal(kx, (B, T * C, H, W), jnp.float32)   # NCHW, TSN-style

    raw = make_module_params(kp, C=C, D=D, K=K, list_splits=list_splits, n_known=n_known)
    kernel_params = prepare_kernel_params(raw, HW=H * W)

    out = icarl_bic_forward(x, kernel_params, num_segments=T, num_class=K, block_batch=2)
    out = jax.block_until_ready(out)

    ref = reference_forward(x, raw, num_segments=T, n_known=n_known)
    assert out.shape == (B, K), out.shape
    # bf16 MXU operands with f32 accumulation: tolerance widened per the perf review.
    assert jnp.allclose(out, ref, atol=1e-2, rtol=1e-2), "mismatch vs reference"

    print("KERNEL_OK")
</pallas_src>

<mosaic_0001>
module attributes {stable_mosaic.version = 11 : i64} {
  func.func @icarl_bic_kernel(%arg0: i32, %arg1: i32, %arg2: memref<1x8x384xbf16, #tpu.memory_space<vmem>>, %arg3: memref<384x128xbf16, #tpu.memory_space<vmem>>, %arg4: memref<1x128xf32, #tpu.memory_space<vmem>>, %arg5: memref<128x128xbf16, #tpu.memory_space<vmem>>, %arg6: memref<1x128xf32, #tpu.memory_space<vmem>>, %arg7: memref<1x2x128xf32, #tpu.memory_space<vmem>>, %arg8: memref<8x128xf32, #tpu.memory_space<vmem>>) attributes {dimension_semantics = [#tpu.dimension_semantics<parallel>, #tpu.dimension_semantics<arbitrary>], iteration_bounds = array<i64: 2, 2>, scalar_prefetch = 0 : i64, scratch_operands = 1 : i64, tpu.core_type = #tpu.core_type<tc>, window_params = [{transform_indices = @transform_0, window_bounds = array<i64: 1, 8, 384>}, {pipeline_mode = #tpu.pipeline_mode<double_buffered>, transform_indices = @transform_1, window_bounds = array<i64: 384, 128>}, {pipeline_mode = #tpu.pipeline_mode<synchronous>, transform_indices = @transform_2, window_bounds = array<i64: 1, 128>}, {pipeline_mode = #tpu.pipeline_mode<synchronous>, transform_indices = @transform_3, window_bounds = array<i64: 128, 128>}, {pipeline_mode = #tpu.pipeline_mode<synchronous>, transform_indices = @transform_4, window_bounds = array<i64: 1, 128>}, {transform_indices = @transform_5, window_bounds = array<i64: 1, 2, 128>}]} {
    %c0_i32 = arith.constant 0 : i32
    %0 = arith.cmpi eq, %arg1, %c0_i32 : i32
    %1 = arith.extui %0 : i1 to i32
    %c0_i32_0 = arith.constant 0 : i32
    %2 = arith.cmpi ne, %1, %c0_i32_0 : i32
    scf.if %2 {
      %cst_10 = arith.constant 0.000000e+00 : f32
      %13 = vector.broadcast %cst_10 : f32 to vector<8x128xf32>
      %c0_11 = arith.constant 0 : index
      %c0_12 = arith.constant 0 : index
      %14 = vector.load %arg8[%c0_11, %c0_12] : memref<8x128xf32, #tpu.memory_space<vmem>>, vector<8x128xf32>
      tpu.vector_store %arg8[%c0_11, %c0_12], %13 {strides = array<i32>} : memref<8x128xf32, #tpu.memory_space<vmem>>, vector<8x128xf32>,
    } else {
    }
    %c0 = arith.constant 0 : index
    %c0_1 = arith.constant 0 : index
    %3 = vector.load %arg8[%c0, %c0_1] : memref<8x128xf32, #tpu.memory_space<vmem>>, vector<8x128xf32>
    %c0_2 = arith.constant 0 : index
    %c0_3 = arith.constant 0 : index
    %c0_4 = arith.constant 0 : index
    %4 = vector.load %arg2[%c0_2, %c0_3, %c0_4] : memref<1x8x384xbf16, #tpu.memory_space<vmem>>, vector<1x8x384xbf16>
    %5 = vector.shape_cast %4 : vector<1x8x384xbf16> to vector<8x384xbf16>
    %c0_5 = arith.constant 0 : index
    %c0_6 = arith.constant 0 : index
    %6 = vector.load %arg3[%c0_5, %c0_6] : memref<384x128xbf16, #tpu.memory_space<vmem>>, vector<384x128xbf16>
    %cst = arith.constant dense<0.000000e+00> : vector<8x128xf32>
    %7 = tpu.matmul %5, %6, %cst {dimension_numbers = #tpu.dot_dimension_numbers<[1], [0], [0], [1], [0, 0, 1, 1], [], []>} : vector<8x384xbf16>, vector<384x128xbf16>, vector<8x128xf32> -> vector<8x128xf32>
    %8 = arith.addf %3, %7 : vector<8x128xf32>
    %c0_7 = arith.constant 0 : index
    %c0_8 = arith.constant 0 : index
    %9 = vector.load %arg8[%c0_7, %c0_8] : memref<8x128xf32, #tpu.memory_space<vmem>>, vector<8x128xf32>
    tpu.vector_store %arg8[%c0_7, %c0_8], %8 {strides = array<i32>} : memref<8x128xf32, #tpu.memory_space<vmem>>, vector<8x128xf32>,
    %c1_i32 = arith.constant 1 : i32
    %10 = arith.cmpi eq, %arg1, %c1_i32 : i32
    %11 = arith.extui %10 : i1 to i32
    %c0_i32_9 = arith.constant 0 : i32
    %12 = arith.cmpi ne, %11, %c0_i32_9 : i32
    scf.if %12 {
      %c0_10 = arith.constant 0 : index
      %c0_11 = arith.constant 0 : index
      %13 = vector.load %arg8[%c0_10, %c0_11] : memref<8x128xf32, #tpu.memory_space<vmem>>, vector<8x128xf32>
      %c0_12 = arith.constant 0 : index
      %c0_13 = arith.constant 0 : index
      %14 = vector.load %arg4[%c0_12, %c0_13] : memref<1x128xf32, #tpu.memory_space<vmem>>, vector<1x128xf32>
      %15 = vector.broadcast %14 : vector<1x128xf32> to vector<8x128xf32>
      %16 = arith.addf %13, %15 : vector<8x128xf32>
      %cst_14 = arith.constant 0.000000e+00 : f32
      %17 = vector.broadcast %cst_14 : f32 to vector<8x128xf32>
      %18 = arith.maximumf %16, %17 : vector<8x128xf32>
      %c0_15 = arith.constant 0 : index
      %c0_16 = arith.constant 0 : index
      %19 = vector.load %arg8[%c0_15, %c0_16] : memref<8x128xf32, #tpu.memory_space<vmem>>, vector<8x128xf32>
      tpu.vector_store %arg8[%c0_15, %c0_16], %18 {strides = array<i32>} : memref<8x128xf32, #tpu.memory_space<vmem>>, vector<8x128xf32>,
      %c0_17 = arith.constant 0 : index
      %c0_18 = arith.constant 0 : index
      %20 = tpu.strided_load %arg8[%c0_17, %c0_18] {strides = array<i32: 4, 1>} : memref<8x128xf32, #tpu.memory_space<vmem>>, vector<2x128xf32>
      %c1 = arith.constant 1 : index
      %c0_19 = arith.constant 0 : index
      %21 = tpu.strided_load %arg8[%c1, %c0_19] {strides = array<i32: 4, 1>} : memref<8x128xf32, #tpu.memory_space<vmem>>, vector<2x128xf32>
      %22 = arith.addf %20, %21 : vector<2x128xf32>
      %c2 = arith.constant 2 : index
      %c0_20 = arith.constant 0 : index
      %23 = tpu.strided_load %arg8[%c2, %c0_20] {strides = array<i32: 4, 1>} : memref<8x128xf32, #tpu.memory_space<vmem>>, vector<2x128xf32>
      %24 = arith.addf %22, %23 : vector<2x128xf32>
      %c3 = arith.constant 3 : index
      %c0_21 = arith.constant 0 : index
      %25 = tpu.strided_load %arg8[%c3, %c0_21] {strides = array<i32: 4, 1>} : memref<8x128xf32, #tpu.memory_space<vmem>>, vector<2x128xf32>
      %26 = arith.addf %24, %25 : vector<2x128xf32>
      %cst_22 = arith.constant 2.500000e-01 : f32
      %27 = vector.broadcast %cst_22 : f32 to vector<2x128xf32>
      %28 = arith.mulf %26, %27 : vector<2x128xf32>
      %29 = arith.truncf %28 : vector<2x128xf32> to vector<2x128xbf16>
      %c0_23 = arith.constant 0 : index
      %c0_24 = arith.constant 0 : index
      %30 = vector.load %arg5[%c0_23, %c0_24] : memref<128x128xbf16, #tpu.memory_space<vmem>>, vector<128x128xbf16>
      %cst_25 = arith.constant dense<0.000000e+00> : vector<2x128xf32>
      %31 = tpu.matmul %29, %30, %cst_25 {dimension_numbers = #tpu.dot_dimension_numbers<[1], [0], [0], [1], [0, 0, 1, 1], [], []>} : vector<2x128xbf16>, vector<128x128xbf16>, vector<2x128xf32> -> vector<2x128xf32>
      %c0_26 = arith.constant 0 : index
      %c0_27 = arith.constant 0 : index
      %32 = vector.load %arg6[%c0_26, %c0_27] : memref<1x128xf32, #tpu.memory_space<vmem>>, vector<1x128xf32>
      %33 = vector.broadcast %32 : vector<1x128xf32> to vector<2x128xf32>
      %34 = arith.addf %31, %33 : vector<2x128xf32>
      %c0_28 = arith.constant 0 : index
      %c0_29 = arith.constant 0 : index
      %c0_30 = arith.constant 0 : index
      %35 = vector.load %arg7[%c0_28, %c0_29, %c0_30] : memref<1x2x128xf32, #tpu.memory_space<vmem>>, vector<1x2x128xf32>
      %36 = vector.shape_cast %35 : vector<1x2x128xf32> to vector<2x128xf32>
      %37 = vector.shape_cast %34 : vector<2x128xf32> to vector<1x2x128xf32>
      tpu.vector_store %arg7[%c0_28, %c0_29, %c0_30], %37 {strides = array<i32>} : memref<1x2x128xf32, #tpu.memory_space<vmem>>, vector<1x2x128xf32>,
    } else {
    }
    return
  }
  func.func @transform_0(%arg0: i32, %arg1: i32) -> (i32, i32, i32) {
    %c0_i32 = arith.constant 0 : i32
    %c0_i32_0 = arith.constant 0 : i32
    return %arg0, %c0_i32, %arg1 : i32, i32, i32
  }
  func.func @transform_1(%arg0: i32, %arg1: i32) -> (i32, i32) {
    %c0_i32 = arith.constant 0 : i32
    %c0_i32_0 = arith.constant 0 : i32
    return %arg1, %c0_i32 : i32, i32
  }
  func.func @transform_2(%arg0: i32, %arg1: i32) -> (i32, i32) {
    %c0_i32 = arith.constant 0 : i32
    %c0_i32_0 = arith.constant 0 : i32
    %c0_i32_1 = arith.constant 0 : i32
    return %c0_i32, %c0_i32_0 : i32, i32
  }
  func.func @transform_3(%arg0: i32, %arg1: i32) -> (i32, i32) {
    %c0_i32 = arith.constant 0 : i32
    %c0_i32_0 = arith.constant 0 : i32
    %c0_i32_1 = arith.constant 0 : i32
    return %c0_i32, %c0_i32_0 : i32, i32
  }
  func.func @transform_4(%arg0: i32, %arg1: i32) -> (i32, i32) {
    %c0_i32 = arith.constant 0 : i32
    %c0_i32_0 = arith.constant 0 : i32
    %c0_i32_1 = arith.constant 0 : i32
    return %c0_i32, %c0_i32_0 : i32, i32
  }
  func.func @transform_5(%arg0: i32, %arg1: i32) -> (i32, i32, i32) {
    %c0_i32 = arith.constant 0 : i32
    %c0_i32_0 = arith.constant 0 : i32
    %c0_i32_1 = arith.constant 0 : i32
    return %arg0, %c0_i32, %c0_i32_0 : i32, i32, i32
  }
}

</mosaic_0001>

<llo_original>
// kernel: tpu_custom_call.1
$region0: #{tpu_custom_call.1}
  #allocation0 [shape = 'u32[]', space=smem, size = 0x4, offset = 0x4, fixed_abs, tag = 'smem constant byte address 0x4 - core index']
  #allocation1 [shape = 'u32[144,128]{1,0:T(1,128)}', space=vmem, size = 0x12000, scoped, tag = 'internal scratch']
  #allocation2 [shape = 'f32[8,128]{1,0:T(8,128)}', space=vmem, size = 0x1000, scoped, tag = 'scratch operand']
  %s0 = inlined_call_operand.hbm [shape: bf16[2,8,768], index: 0, kind: input, shape index: {}]
  %s1 = inlined_call_operand.hbm [shape: bf16[768,128], index: 1, kind: input, shape index: {}]
  %s2 = inlined_call_operand.vmem [shape: f32[1,128], index: 2, kind: input, shape index: {}]
  %s3 = inlined_call_operand.hbm [shape: bf16[128,128], index: 3, kind: input, shape index: {}]
  %s4 = inlined_call_operand.vmem [shape: f32[1,128], index: 4, kind: input, shape index: {}]
  %s5 = inlined_call_operand.hbm [shape: f32[2,2,128], index: 5, kind: output, shape index: {}]
  %s6 = sld [smem:[#allocation0]]
  $region73: #{tpu_custom_call.1} parent=0
    _
  %s8 = ssub.s32 1, %s6
  %s9 = scalar_select 0, %s8, %s6
  $region1: #{tpu_custom_call.1} parent=0
    #allocation3 [shape = 'u8[12288]{0}', space=vmem, size = 0x3000, scoped, tag = 'input window, operand 0']
    #allocation4 [shape = 's32[2]{0}', space=sflag, size = 0x8, scoped, tag = 'scoped memory for tpu_custom_call.1']
    #allocation5 [shape = 's32[2]{0}', space=sflag, size = 0x8, scoped, tag = 'scoped memory for tpu_custom_call.1']
    #allocation6 [shape = 'u8[196608]{0}', space=vmem, size = 0x30000, scoped, tag = 'input window, operand 1']
    #allocation7 [shape = 's32[2]{0}', space=sflag, size = 0x8, scoped, tag = 'scoped memory for tpu_custom_call.1']
    #allocation8 [shape = 'u8[32768]{0}', space=vmem, size = 0x8000, scoped, tag = 'input window, operand 3, single buffered']
    #allocation9 [shape = 'u8[2048]{0}', space=vmem, size = 0x800, scoped, tag = 'output window, operand 0']
    %10 = vsyncpa [#allocation4], 0
    %s11 = scalar_lea.sflag [#allocation4], 1
    %12 = vsyncpa %s11, 0
    %13 = vsyncpa [#allocation7], 0
    %s14 = scalar_lea.sflag [#allocation7], 1
    %15 = vsyncpa %s14, 0
    %16 = vsyncpa [#allocation5], 0
    %s17 = scalar_lea.sflag [#allocation5], 1
    %18 = vsyncpa %s17, 0
    loop: start=0, step=1, limit=6
    $region2: #{tpu_custom_call.1} parent=1 // loop_pre_header
      _
    $region3: #{tpu_custom_call.1} parent=1 // loop_header
      %s20 = sphi 0, %s24
      %p21 = scmp.ge.s32.totalorder %s20, 6
      %s27 = sphi 0, %s39
      %s28 = sphi 0, %s35
      %s29 = sphi 0, %s27
      %s30 = sphi 0, %s28
      %s31 = sphi 0, %s29
      %s32 = sphi 0, %s30
      %s44 = sphi 0, %s46
      %s47 = sphi 0, %s44
      %s48 = sphi 0, %s47
      %s64 = sphi 0, %s48
      %s70 = sphi 0, %s72
      %s73 = sphi 0, %s70
      %s74 = sphi 0, %s73
      %s90 = sphi 0, %s74
      %s94 = sphi 0, %s94
      %s96 = sphi 0, %s94
      %s97 = sphi 0, %s96
      %s111 = sphi 0, %s97
      %s115 = sphi 0, %s115
      %s117 = sphi 0, %s115
      %s118 = sphi 0, %s117
      %s132 = sphi 0, %s118
      %s136 = sphi 0, %s136
      %s138 = sphi 0, %s136
      %s139 = sphi 0, %s138
      %s153 = sphi 0, %s139
      %s159 = sphi 0, %s161
      %s162 = sphi 0, %s159
      %s163 = sphi 0, %s162
      %s179 = sphi 0, %s163
    $region4: #{tpu_custom_call.1} parent=1 // loop_header_branch
      %23 = sbr.rel (%p21) target = $region8
    $region5: #{tpu_custom_call.1} parent=1 // loop_body
      %s25 = ssub.s32 %s20, 1
      %s26 = ssub.s32 %s20, 2
      %s33 = sadd.s32 1, %s28
      %p34 = scmp.ge.s32.totalorder %s33, 2
      %s35 = scalar_select %p34, 0, %s33
      %s36 = sadd.s32 1, %s27
      %s37 = scalar_select %p34, %s36, %s27
      %p38 = scmp.ge.s32.totalorder %s37, 2
      %s39 = scalar_select %p38, 0, %s37
      %s40 = ssub.s32 %s27, %s39
      %s41 = ssub.s32 %s28, %s35
      %s42 = sor.u32 %s40, %s41
      %p43 = scmp.eq.s32.totalorder %s42, 0
      %s45 = sadd.s32 %s44, 1
      %s46 = scalar_select %p43, %s44, %s45
      %p49 = pneg %p43
      %p50 = scmp.eq.s32.totalorder %s20, 3
      %p51 = por %p49, %p50
      %p52 = scmp.ne.s32.totalorder %s44, %s47
      %p53 = scmp.eq.s32.totalorder %s20, 0
      %p54 = por %p52, %p53
      %p55 = scmp.ne.s32.totalorder %s44, %s47
      %p56 = scmp.eq.s32.totalorder %s25, 3
      %p57 = por %p55, %p56
      %p58 = scmp.ne.s32.totalorder %s47, %s48
      %p59 = scmp.eq.s32.totalorder %s25, 0
      %p60 = por %p58, %p59
      %p61 = scmp.ne.s32.totalorder %s47, %s48
      %p62 = scmp.eq.s32.totalorder %s26, 3
      %p63 = por %p61, %p62
      %p65 = scmp.ne.s32.totalorder %s48, %s64
      %p66 = scmp.eq.s32.totalorder %s26, 0
      %p67 = por %p65, %p66
      %s68 = ssub.s32 %s28, %s35
      %p69 = scmp.eq.s32.totalorder %s68, 0
      %s71 = sadd.s32 %s70, 1
      %s72 = scalar_select %p69, %s70, %s71
      %p75 = pneg %p69
      %p76 = scmp.eq.s32.totalorder %s20, 3
      %p77 = por %p75, %p76
      %p78 = scmp.ne.s32.totalorder %s70, %s73
      %p79 = scmp.eq.s32.totalorder %s20, 0
      %p80 = por %p78, %p79
      %p81 = scmp.ne.s32.totalorder %s70, %s73
      %p82 = scmp.eq.s32.totalorder %s25, 3
      %p83 = por %p81, %p82
      %p84 = scmp.ne.s32.totalorder %s73, %s74
      %p85 = scmp.eq.s32.totalorder %s25, 0
      %p86 = por %p84, %p85
      %p87 = scmp.ne.s32.totalorder %s73, %s74
      %p88 = scmp.eq.s32.totalorder %s26, 3
      %p89 = por %p87, %p88
      %p91 = scmp.ne.s32.totalorder %s74, %s90
      %p92 = scmp.eq.s32.totalorder %s26, 0
      %p93 = por %p91, %p92
      %s95 = sadd.s32 %s94, 1
      %p98 = scmp.eq.s32.totalorder %s20, 3
      %p99 = scmp.ne.s32.totalorder %s94, %s96
      %p100 = scmp.eq.s32.totalorder %s20, 0
      %p101 = por %p99, %p100
      %p102 = scmp.ne.s32.totalorder %s94, %s96
      %p103 = scmp.eq.s32.totalorder %s25, 3
      %p104 = por %p102, %p103
      %p105 = scmp.ne.s32.totalorder %s96, %s97
      %p106 = scmp.eq.s32.totalorder %s25, 0
      %p107 = por %p105, %p106
      %p108 = scmp.ne.s32.totalorder %s96, %s97
      %p109 = scmp.eq.s32.totalorder %s26, 3
      %p110 = por %p108, %p109
      %p112 = scmp.ne.s32.totalorder %s97, %s111
      %p113 = scmp.eq.s32.totalorder %s26, 0
      %p114 = por %p112, %p113
      %s116 = sadd.s32 %s115, 1
      %p119 = scmp.eq.s32.totalorder %s20, 3
      %p120 = scmp.ne.s32.totalorder %s115, %s117
      %p121 = scmp.eq.s32.totalorder %s20, 0
      %p122 = por %p120, %p121
      %p123 = scmp.ne.s32.totalorder %s115, %s117
      %p124 = scmp.eq.s32.totalorder %s25, 3
      %p125 = por %p123, %p124
      %p126 = scmp.ne.s32.totalorder %s117, %s118
      %p127 = scmp.eq.s32.totalorder %s25, 0
      %p128 = por %p126, %p127
      %p129 = scmp.ne.s32.totalorder %s117, %s118
      %p130 = scmp.eq.s32.totalorder %s26, 3
      %p131 = por %p129, %p130
      %p133 = scmp.ne.s32.totalorder %s118, %s132
      %p134 = scmp.eq.s32.totalorder %s26, 0
      %p135 = por %p133, %p134
      %s137 = sadd.s32 %s136, 1
      %p140 = scmp.eq.s32.totalorder %s20, 3
      %p141 = scmp.ne.s32.totalorder %s136, %s138
      %p142 = scmp.eq.s32.totalorder %s20, 0
      %p143 = por %p141, %p142
      %p144 = scmp.ne.s32.totalorder %s136, %s138
      %p145 = scmp.eq.s32.totalorder %s25, 3
      %p146 = por %p144, %p145
      %p147 = scmp.ne.s32.totalorder %s138, %s139
      %p148 = scmp.eq.s32.totalorder %s25, 0
      %p149 = por %p147, %p148
      %p150 = scmp.ne.s32.totalorder %s138, %s139
      %p151 = scmp.eq.s32.totalorder %s26, 3
      %p152 = por %p150, %p151
      %p154 = scmp.ne.s32.totalorder %s139, %s153
      %p155 = scmp.eq.s32.totalorder %s26, 0
      %p156 = por %p154, %p155
      %s157 = ssub.s32 %s27, %s39
      %p158 = scmp.eq.s32.totalorder %s157, 0
      %s160 = sadd.s32 %s159, 1
      %s161 = scalar_select %p158, %s159, %s160
      %p164 = pneg %p158
      %p165 = scmp.eq.s32.totalorder %s20, 3
      %p166 = por %p164, %p165
      %p167 = scmp.ne.s32.totalorder %s159, %s162
      %p168 = scmp.eq.s32.totalorder %s20, 0
      %p169 = por %p167, %p168
      %p170 = scmp.ne.s32.totalorder %s159, %s162
      %p171 = scmp.eq.s32.totalorder %s25, 3
      %p172 = por %p170, %p171
      %p173 = scmp.ne.s32.totalorder %s162, %s163
      %p174 = scmp.eq.s32.totalorder %s25, 0
      %p175 = por %p173, %p174
      %p176 = scmp.ne.s32.totalorder %s162, %s163
      %p177 = scmp.eq.s32.totalorder %s26, 3
      %p178 = por %p176, %p177
      %p180 = scmp.ne.s32.totalorder %s163, %s179
      %p181 = scmp.eq.s32.totalorder %s26, 0
      %p182 = por %p180, %p181
      %p183 = scmp.le.s32.totalorder 1, %s20
      %p184 = scmp.lt.s32.totalorder %s20, 5
      %p185 = pnand %p183, %p184
      %p186 = pneg %p185
      // Predicated region
      $region9: #{tpu_custom_call.1} parent=5 // pred_check
        _
      $region10: #{tpu_custom_call.1} parent=5 // pred_check_branch
        %188 = sbr.rel (%p185) target = $region12
      $region11: #{tpu_custom_call.1} parent=5 // pred_region
        %s189 = ssub.s32 %s20, 1
        // Predicated region
        $region13: #{tpu_custom_call.1} parent=11 // pred_check
          %p190 = pneg %p107
        $region14: #{tpu_custom_call.1} parent=11 // pred_check_branch
          %192 = sbr.rel (%p190) target = $region16
        $region15: #{tpu_custom_call.1} parent=11 // pred_region
          _
        $region16: #{tpu_custom_call.1} parent=11 // pred_fallthru
          _
        // Predicated region
        $region17: #{tpu_custom_call.1} parent=11 // pred_check
          %p193 = pneg %p128
        $region18: #{tpu_custom_call.1} parent=11 // pred_check_branch
          %195 = sbr.rel (%p193) target = $region20
        $region19: #{tpu_custom_call.1} parent=11 // pred_region
          %s197 = ssub.s32 1024, 1024
          %198 = vsyncadd [#allocation7], %s197
          %s199 = sshll.u32 [#allocation8], 4
          %s200 = int_to_ptr.vmem [resolvable:$true] %s199
          %205 = dma.hbm_to_vmem [thread:$0]  %s3, 1024, %s200, [#allocation7], 64, 64, 4
        $region20: #{tpu_custom_call.1} parent=11 // pred_fallthru
          _
        // Predicated region
        $region21: #{tpu_custom_call.1} parent=11 // pred_check
          %p206 = pneg %p149
        $region22: #{tpu_custom_call.1} parent=11 // pred_check_branch
          %208 = sbr.rel (%p206) target = $region24
        $region23: #{tpu_custom_call.1} parent=11 // pred_region
          _
        $region24: #{tpu_custom_call.1} parent=11 // pred_fallthru
          _
      $region12: #{tpu_custom_call.1} parent=5 // pred_fallthru
        _
      %p209 = scmp.lt.s32.totalorder %s20, 4
      // Predicated region
      $region25: #{tpu_custom_call.1} parent=5 // pred_check
        %p210 = pneg %p209
      $region26: #{tpu_custom_call.1} parent=5 // pred_check_branch
        %212 = sbr.rel (%p210) target = $region28
      $region27: #{tpu_custom_call.1} parent=5 // pred_region
        // Predicated region
        $region29: #{tpu_custom_call.1} parent=27 // pred_check
          %p213 = pneg %p54
        $region30: #{tpu_custom_call.1} parent=27 // pred_check_branch
          %215 = sbr.rel (%p213) target = $region32
        $region31: #{tpu_custom_call.1} parent=27 // pred_region
          %s216 = sand.u32 %s44, 1
          %s217 = scalar_lea.sflag [#allocation4], %s216
          %s218 = sand.u32 %s44, 1
          %s219 = smul.addr %s218, 12
          %s220 = scalar_lea.vmem [#allocation3], %s219
          %s221 = smul.u32 3, %s28
          %s223 = ssub.s32 192, 192
          %224 = vsyncadd %s217, %s223
          %s225 = smul.addr %s27, 6
          %s226 = sadd.s32 %s221, %s225
          %s227 = smul.addr %s226, 64
          %s228 = scalar_lea.hbm %s0, %s227
          %s230 = sshll.u32 %s220, 4
          %s231 = int_to_ptr.vmem [resolvable:$true] %s230
          %233 = dma.hbm_to_vmem [thread:$0]  %s228, 192, %s231, %s217
        $region32: #{tpu_custom_call.1} parent=27 // pred_fallthru
          _
        // Predicated region
        $region33: #{tpu_custom_call.1} parent=27 // pred_check
          %p234 = pneg %p80
        $region34: #{tpu_custom_call.1} parent=27 // pred_check_branch
          %236 = sbr.rel (%p234) target = $region36
        $region35: #{tpu_custom_call.1} parent=27 // pred_region
          %s237 = sand.u32 %s20, 1
          %s238 = scalar_lea.sflag [#allocation7], %s237
          %s239 = sand.u32 %s70, 1
          %s240 = smul.addr %s239, 192
          %s241 = scalar_lea.vmem [#allocation6], %s240
          %s242 = smul.u32 48, %s28
          %s244 = ssub.s32 3072, 3072
          %245 = vsyncadd %s238, %s244
          %s246 = smul.addr %s242, 64
          %s247 = scalar_lea.hbm %s1, %s246
          %s248 = sshll.u32 %s241, 4
          %s249 = int_to_ptr.vmem [resolvable:$true] %s248
          %254 = dma.hbm_to_vmem [thread:$0]  %s247, 3072, %s249, %s238, 64, 64, 4
        $region36: #{tpu_custom_call.1} parent=27 // pred_fallthru
          _
      $region28: #{tpu_custom_call.1} parent=5 // pred_fallthru
        _
      %p255 = scmp.le.s32.totalorder 1, %s20
      %p256 = scmp.lt.s32.totalorder %s20, 5
      %p257 = pnand %p255, %p256
      %p258 = pneg %p257
      // Predicated region
      $region37: #{tpu_custom_call.1} parent=5 // pred_check
        _
      $region38: #{tpu_custom_call.1} parent=5 // pred_check_branch
        %260 = sbr.rel (%p257) target = $region40
      $region39: #{tpu_custom_call.1} parent=5 // pred_region
        %s261 = ssub.s32 %s20, 1
        %s262 = sand.u32 %s47, 1
        %s263 = scalar_lea.sflag [#allocation4], %s262
        %s264 = sand.u32 %s47, 1
        %s265 = smul.addr %s264, 12
        %s266 = scalar_lea.vmem [#allocation3], %s265
        // Predicated region
        $region41: #{tpu_custom_call.1} parent=39 // pred_check
          %p267 = pneg %p60
        $region42: #{tpu_custom_call.1} parent=39 // pred_check_branch
          %269 = sbr.rel (%p267) target = $region44
        $region43: #{tpu_custom_call.1} parent=39 // pred_region
          %270 = dma.done %s263, 192
        $region44: #{tpu_custom_call.1} parent=39 // pred_fallthru
          _
        %s271 = sand.u32 %s25, 1
        %s272 = scalar_lea.sflag [#allocation7], %s271
        %s273 = sand.u32 %s73, 1
        %s274 = smul.addr %s273, 192
        %s275 = scalar_lea.vmem [#allocation6], %s274
        // Predicated region
        $region45: #{tpu_custom_call.1} parent=39 // pred_check
          %p276 = pneg %p86
        $region46: #{tpu_custom_call.1} parent=39 // pred_check_branch
          %278 = sbr.rel (%p276) target = $region48
        $region47: #{tpu_custom_call.1} parent=39 // pred_region
          %279 = dma.done %s272, 3072
        $region48: #{tpu_custom_call.1} parent=39 // pred_fallthru
          _
        // Predicated region
        $region49: #{tpu_custom_call.1} parent=39 // pred_check
          %p280 = pneg %p128
        $region50: #{tpu_custom_call.1} parent=39 // pred_check_branch
          %282 = sbr.rel (%p280) target = $region52
        $region51: #{tpu_custom_call.1} parent=39 // pred_region
          %283 = dma.done [#allocation7], 1024
        $region52: #{tpu_custom_call.1} parent=39 // pred_fallthru
          _
        %s284 = sand.u32 %s47, 1
        %s285 = scalar_lea.sflag [#allocation4], %s284
        %s286 = sand.u32 %s47, 1
        %s287 = smul.addr %s286, 12
        %s288 = scalar_lea.vmem [#allocation3], %s287
        %p289 = pneg %p60
        %p290 = pneg %p57
        %s291 = sand.u32 %s25, 1
        %s292 = scalar_lea.sflag [#allocation7], %s291
        %s293 = sand.u32 %s73, 1
        %s294 = smul.addr %s293, 192
        %s295 = scalar_lea.vmem [#allocation6], %s294
        %p296 = pneg %p86
        %p297 = pneg %p83
        %p298 = pneg %p107
        %p299 = pneg %p104
        %p300 = pneg %p128
        %p301 = pneg %p125
        %p302 = pneg %p149
        %p303 = pneg %p146
        %p304 = pneg %p175
        %p305 = pneg %p172
        %s306 = sand.u32 %s162, 1
        %s307 = scalar_lea.sflag [#allocation5], %s306
        %s308 = sand.u32 %s162, 1
        %s309 = smul.addr %s308, 2
        %s310 = scalar_lea.vmem [#allocation9], %s309
        %s311 = smul.u32 3, %s30
        %s312 = smul.u32 48, %s30
        %p314 = scmp.eq.s32.totalorder %s30, 0
        // Predicated region
        $region53: #{tpu_custom_call.1} parent=39 // pred_check
          %p315 = pneg %p314
        $region54: #{tpu_custom_call.1} parent=39 // pred_check_branch
          %317 = sbr.rel (%p315) target = $region56
        $region55: #{tpu_custom_call.1} parent=39 // pred_region
          %318 = vst [vmem:[#allocation2] sm:$0xff] 0.0
        $region56: #{tpu_custom_call.1} parent=39 // pred_fallthru
          _
        %v319 = vld [vmem:[#allocation2] sm:$0xff]
        %v320 = vld [vmem:[%s266] sm:$0xff]
        %v321 = vld [vmem:[%s266 + $0x8] sm:$0xf]
        %v322 = vld [vmem:[%s275] sm:$0xf]
        %v323 = vld [vmem:[%s275 + $0x4] sm:$0xf]
        %v324 = vld [vmem:[%s275 + $0x8] sm:$0xf]
        %v325 = vld [vmem:[%s275 + $0xc] sm:$0xf]
        %v326 = vld [vmem:[%s275 + $0x10] sm:$0xf]
        %v327 = vld [vmem:[%s275 + $0x14] sm:$0xf]
        %v328 = vld [vmem:[%s275 + $0x18] sm:$0xf]
        %v329 = vld [vmem:[%s275 + $0x1c] sm:$0xf]
        %v330 = vld [vmem:[%s275 + $0x20] sm:$0xf]
        %v331 = vld [vmem:[%s275 + $0x24] sm:$0xf]
        %v332 = vld [vmem:[%s275 + $0x28] sm:$0xf]
        %v333 = vld [vmem:[%s275 + $0x2c] sm:$0xf]
        %v334 = vld [vmem:[%s275 + $0x30] sm:$0xf]
        %v335 = vld [vmem:[%s275 + $0x34] sm:$0xf]
        %v336 = vld [vmem:[%s275 + $0x38] sm:$0xf]
        %v337 = vld [vmem:[%s275 + $0x3c] sm:$0xf]
        %v338 = vld [vmem:[%s275 + $0x40] sm:$0xf]
        %v339 = vld [vmem:[%s275 + $0x44] sm:$0xf]
        %v340 = vld [vmem:[%s275 + $0x48] sm:$0xf]
        %v341 = vld [vmem:[%s275 + $0x4c] sm:$0xf]
        %v342 = vld [vmem:[%s275 + $0x50] sm:$0xf]
        %v343 = vld [vmem:[%s275 + $0x54] sm:$0xf]
        %v344 = vld [vmem:[%s275 + $0x58] sm:$0xf]
        %v345 = vld [vmem:[%s275 + $0x5c] sm:$0xf]
        %v346 = vld [vmem:[%s275 + $0x60] sm:$0xf]
        %v347 = vld [vmem:[%s275 + $0x64] sm:$0xf]
        %v348 = vld [vmem:[%s275 + $0x68] sm:$0xf]
        %v349 = vld [vmem:[%s275 + $0x6c] sm:$0xf]
        %v350 = vld [vmem:[%s275 + $0x70] sm:$0xf]
        %v351 = vld [vmem:[%s275 + $0x74] sm:$0xf]
        %v352 = vld [vmem:[%s275 + $0x78] sm:$0xf]
        %v353 = vld [vmem:[%s275 + $0x7c] sm:$0xf]
        %v354 = vld [vmem:[%s275 + $0x80] sm:$0xf]
        %v355 = vld [vmem:[%s275 + $0x84] sm:$0xf]
        %v356 = vld [vmem:[%s275 + $0x88] sm:$0xf]
        %v357 = vld [vmem:[%s275 + $0x8c] sm:$0xf]
        %v358 = vld [vmem:[%s275 + $0x90] sm:$0xf]
        %v359 = vld [vmem:[%s275 + $0x94] sm:$0xf]
        %v360 = vld [vmem:[%s275 + $0x98] sm:$0xf]
        %v361 = vld [vmem:[%s275 + $0x9c] sm:$0xf]
        %v362 = vld [vmem:[%s275 + $0xa0] sm:$0xf]
        %v363 = vld [vmem:[%s275 + $0xa4] sm:$0xf]
        %v364 = vld [vmem:[%s275 + $0xa8] sm:$0xf]
        %v365 = vld [vmem:[%s275 + $0xac] sm:$0xf]
        %v366 = vld [vmem:[%s275 + $0xb0] sm:$0xf]
        %v367 = vld [vmem:[%s275 + $0xb4] sm:$0xf]
        %v368 = vld [vmem:[%s275 + $0xb8] sm:$0xf]
        %v369 = vld [vmem:[%s275 + $0xbc] sm:$0xf]
        %v372 = vunpack.c.l.b16 %v320
        %v373 = vunpack.c.h.b16 %v320
        %v374 = vunpack.c.l.b16 %v321
        %v375 = vpack.c.b16 %v372, %v372
        %v376 = vpack.c.b16 %v373, %v373
        %v377 = vpack.c.b16 %v374, %v374
        %v429 = vunpack.c.l.b16 %v322
        %v430 = vunpack.c.l.b16 %v323
        %v431 = vunpack.c.l.b16 %v324
        %v432 = vunpack.c.l.b16 %v325
        %v433 = vunpack.c.l.b16 %v326
        %v434 = vunpack.c.l.b16 %v327
        %v435 = vunpack.c.l.b16 %v328
        %v436 = vunpack.c.l.b16 %v329
        %v437 = vunpack.c.l.b16 %v330
        %v438 = vunpack.c.l.b16 %v331
        %v439 = vunpack.c.l.b16 %v332
        %v440 = vunpack.c.l.b16 %v333
        %v441 = vunpack.c.l.b16 %v334
        %v442 = vunpack.c.l.b16 %v335
        %v443 = vunpack.c.l.b16 %v336
        %v444 = vunpack.c.l.b16 %v337
        %v445 = vunpack.c.l.b16 %v338
        %v446 = vunpack.c.l.b16 %v339
        %v447 = vunpack.c.l.b16 %v340
        %v448 = vunpack.c.l.b16 %v341
        %v449 = vunpack.c.l.b16 %v342
        %v450 = vunpack.c.l.b16 %v343
        %v451 = vunpack.c.l.b16 %v344
        %v452 = vunpack.c.l.b16 %v345
        %v453 = vunpack.c.l.b16 %v346
        %v454 = vunpack.c.l.b16 %v347
        %v455 = vunpack.c.l.b16 %v348
        %v456 = vunpack.c.l.b16 %v349
        %v457 = vunpack.c.l.b16 %v350
        %v458 = vunpack.c.l.b16 %v351
        %v459 = vunpack.c.l.b16 %v352
        %v460 = vunpack.c.l.b16 %v353
        %v461 = vunpack.c.l.b16 %v354
        %v462 = vunpack.c.l.b16 %v355
        %v463 = vunpack.c.l.b16 %v356
        %v464 = vunpack.c.l.b16 %v357
        %v465 = vunpack.c.l.b16 %v358
        %v466 = vunpack.c.l.b16 %v359
        %v467 = vunpack.c.l.b16 %v360
        %v468 = vunpack.c.l.b16 %v361
        %v469 = vunpack.c.l.b16 %v362
        %v470 = vunpack.c.l.b16 %v363
        %v471 = vunpack.c.l.b16 %v364
        %v472 = vunpack.c.l.b16 %v365
        %v473 = vunpack.c.l.b16 %v366
        %v474 = vunpack.c.l.b16 %v367
        %v475 = vunpack.c.l.b16 %v368
        %v476 = vunpack.c.l.b16 %v369
        %v477 = vpack.c.b16 %v430, %v429
        %v478 = vpack.c.b16 %v432, %v431
        %v479 = vpack.c.b16 %v434, %v433
        %v480 = vpack.c.b16 %v436, %v435
        %v481 = vpack.c.b16 %v438, %v437
        %v482 = vpack.c.b16 %v440, %v439
        %v483 = vpack.c.b16 %v442, %v441
        %v484 = vpack.c.b16 %v444, %v443
        %v485 = vpack.c.b16 %v446, %v445
        %v486 = vpack.c.b16 %v448, %v447
        %v487 = vpack.c.b16 %v450, %v449
        %v488 = vpack.c.b16 %v452, %v451
        %v489 = vpack.c.b16 %v454, %v453
        %v490 = vpack.c.b16 %v456, %v455
        %v491 = vpack.c.b16 %v458, %v457
        %v492 = vpack.c.b16 %v460, %v459
        %v493 = vpack.c.b16 %v462, %v461
        %v494 = vpack.c.b16 %v464, %v463
        %v495 = vpack.c.b16 %v466, %v465
        %v496 = vpack.c.b16 %v468, %v467
        %v497 = vpack.c.b16 %v470, %v469
        %v498 = vpack.c.b16 %v472, %v471
        %v499 = vpack.c.b16 %v474, %v473
        %v500 = vpack.c.b16 %v476, %v475
        %525 = vmatprep.subr.bf16.mxu0 0
        %526 = vmatpush1.bf16.msra.mxu0 %v477
        %527 = vmatprep.subr.bf16.mxu0 0
        %528 = vmatpush1.bf16.msra.mxu0 %v478
        %529 = vmatprep.subr.bf16.mxu0 0
        %530 = vmatpush1.bf16.msra.mxu0 %v479
        %531 = vmatprep.subr.bf16.mxu0 0
        %532 = vmatpush1.bf16.msra.mxu0 %v480
        %533 = vmatprep.subr.bf16.mxu0 0
        %534 = vmatpush1.bf16.msra.mxu0 %v481
        %535 = vmatprep.subr.bf16.mxu0 0
        %536 = vmatpush1.bf16.msra.mxu0 %v482
        %537 = vmatprep.subr.bf16.mxu0 0
        %538 = vmatpush1.bf16.msra.mxu0 %v483
        %539 = vmatprep.subr.bf16.mxu0 0
        %540 = vmatpush1.bf16.msra.mxu0 %v484
        %541 = vmatprep.subr.bf16.mxu0 0
        %542 = vmatpush1.bf16.msra.mxu0 %v485
        %543 = vmatprep.subr.bf16.mxu0 0
        %544 = vmatpush1.bf16.msra.mxu0 %v486
        %545 = vmatprep.subr.bf16.mxu0 0
        %546 = vmatpush1.bf16.msra.mxu0 %v487
        %547 = vmatprep.subr.bf16.mxu0 0
        %548 = vmatpush1.bf16.msra.mxu0 %v488
        %549 = vmatprep.subr.bf16.mxu0 0
        %550 = vmatpush1.bf16.msra.mxu0 %v489
        %551 = vmatprep.subr.bf16.mxu0 0
        %552 = vmatpush1.bf16.msra.mxu0 %v490
        %553 = vmatprep.subr.bf16.mxu0 0
        %554 = vmatpush1.bf16.msra.mxu0 %v491
        %555 = vmatprep.subr.bf16.mxu0 0
        %556 = vmatpush1.bf16.msra.mxu0 %v492
        %557 = vmatprep.mubr.bf16.mxu0 %v376
        %558 = vmatmul.mubr.bf16.gmra.mrb[0].mxu0 %v375
        %v559 = vpop.f32.mrb[0].mxu0
        %v560 = vadd.f32 0.0, %v559
        %v561 = vpop.f32.mrb[0].mxu0
        %v562 = vpop.f32.mrb[0].mxu0
        %v563 = vpop.f32.mrb[0].mxu0
        %564 = vdwg.mxu0
        %565 = vmatprep.subr.bf16.mxu0 0
        %566 = vmatpush1.bf16.msra.mxu0 %v493
        %567 = vmatprep.subr.bf16.mxu0 0
        %568 = vmatpush1.bf16.msra.mxu0 %v494
        %569 = vmatprep.subr.bf16.mxu0 0
        %570 = vmatpush1.bf16.msra.mxu0 %v495
        %571 = vmatprep.subr.bf16.mxu0 0
        %572 = vmatpush1.bf16.msra.mxu0 %v496
        %573 = vmatprep.subr.bf16.mxu0 0
        %574 = vmatpush1.bf16.msra.mxu0 %v497
        %575 = vmatprep.subr.bf16.mxu0 0
        %576 = vmatpush1.bf16.msra.mxu0 %v498
        %577 = vmatprep.subr.bf16.mxu0 0
        %578 = vmatpush1.bf16.msra.mxu0 %v499
        %579 = vmatprep.subr.bf16.mxu0 0
        %580 = vmatpush1.bf16.msra.mxu0 %v500
        %581 = vmatprep.subr.bf16.mxu0 0
        %582 = vmatpush1.bf16.msra.mxu0 0
        %583 = vmatprep.subr.bf16.mxu0 0
        %584 = vmatpush1.bf16.msra.mxu0 0
        %585 = vmatprep.subr.bf16.mxu0 0
        %586 = vmatpush1.bf16.msra.mxu0 0
        %587 = vmatprep.subr.bf16.mxu0 0
        %588 = vmatpush1.bf16.msra.mxu0 0
        %589 = vmatprep.subr.bf16.mxu0 0
        %590 = vmatpush1.bf16.msra.mxu0 0
        %591 = vmatprep.subr.bf16.mxu0 0
        %592 = vmatpush1.bf16.msra.mxu0 0
        %593 = vmatprep.subr.bf16.mxu0 0
        %594 = vmatpush1.bf16.msra.mxu0 0
        %595 = vmatprep.subr.bf16.mxu0 0
        %596 = vmatpush1.bf16.msra.mxu0 0
        %597 = vmatprep.mubr.bf16.mxu0 0
        %598 = vmatmul.mubr.bf16.gmra.mrb[0].mxu0 %v377
        %v599 = vpop.f32.mrb[0].mxu0
        %v600 = vadd.f32 %v560, %v599
        %v601 = vpop.f32.mrb[0].mxu0
        %v602 = vpop.f32.mrb[0].mxu0
        %v603 = vpop.f32.mrb[0].mxu0
        %604 = vdwg.mxu0
        %v605 = vadd.f32 %v319, %v600
        %606 = vst [vmem:[#allocation2] sm:$0xff] %v605
        %p607 = scmp.eq.s32.totalorder %s30, 1
        // Predicated region
        $region57: #{tpu_custom_call.1} parent=39 // pred_check
          %p608 = pneg %p607
        $region58: #{tpu_custom_call.1} parent=39 // pred_check_branch
          %610 = sbr.rel (%p608) target = $region60
        $region59: #{tpu_custom_call.1} parent=39 // pred_region
          %v611 = vld [vmem:[#allocation2] sm:$0xff]
          %v612 = vld [vmem:[%s2] sm:$0x1]
          %v614 = vlaneseq
          %v615 = vshrl.u32 %v614, 7
          %v616 = vsub.s32 0, %v615
          %v617 = vrot.slane %v612, %v616
          %v619 = vadd.f32 %v611, %v617
          %v620 = vmax.f32 %v619, 0.0
          %621 = vst [vmem:[#allocation2] sm:$0xff] %v620
          %v622 = vld [vmem:[#allocation2] ss:$4 sm:$0x3]
          %s623 = scalar_lea.vmem [#allocation2], 1
          %v624 = vld [vmem:[%s623] ss:$4 sm:$0x3]
          %v625 = vadd.f32 %v622, %v624
          %s626 = scalar_lea.vmem [#allocation2], 2
          %v627 = vld [vmem:[%s626] ss:$4 sm:$0x3]
          %v628 = vadd.f32 %v625, %v627
          %s629 = scalar_lea.vmem [#allocation2], 3
          %v630 = vld [vmem:[%s629] ss:$4 sm:$0x3]
          %v631 = vadd.f32 %v628, %v630
          %v632 = vmul.f32 %v631, 0.25
          %v633 = vpack.c.bf16 %v632, %v632
          %v634 = vld [vmem:[#allocation8] sm:$0xf]
          %v635 = vld [vmem:[#allocation8 + $0x4] sm:$0xf]
          %v636 = vld [vmem:[#allocation8 + $0x8] sm:$0xf]
          %v637 = vld [vmem:[#allocation8 + $0xc] sm:$0xf]
          %v638 = vld [vmem:[#allocation8 + $0x10] sm:$0xf]
          %v639 = vld [vmem:[#allocation8 + $0x14] sm:$0xf]
          %v640 = vld [vmem:[#allocation8 + $0x18] sm:$0xf]
          %v641 = vld [vmem:[#allocation8 + $0x1c] sm:$0xf]
          %v642 = vld [vmem:[#allocation8 + $0x20] sm:$0xf]
          %v643 = vld [vmem:[#allocation8 + $0x24] sm:$0xf]
          %v644 = vld [vmem:[#allocation8 + $0x28] sm:$0xf]
          %v645 = vld [vmem:[#allocation8 + $0x2c] sm:$0xf]
          %v646 = vld [vmem:[#allocation8 + $0x30] sm:$0xf]
          %v647 = vld [vmem:[#allocation8 + $0x34] sm:$0xf]
          %v648 = vld [vmem:[#allocation8 + $0x38] sm:$0xf]
          %v649 = vld [vmem:[#allocation8 + $0x3c] sm:$0xf]
          %v650 = vld [vmem:[%s4] sm:$0x1]
          %v652 = vlaneseq
          %v653 = vshrl.u32 %v652, 7
          %v654 = vsub.s32 0, %v653
          %v655 = vrot.slane %v650, %v654
          %v673 = vunpack.c.l.b16 %v634
          %v674 = vunpack.c.l.b16 %v635
          %v675 = vunpack.c.l.b16 %v636
          %v676 = vunpack.c.l.b16 %v637
          %v677 = vunpack.c.l.b16 %v638
          %v678 = vunpack.c.l.b16 %v639
          %v679 = vunpack.c.l.b16 %v640
          %v680 = vunpack.c.l.b16 %v641
          %v681 = vunpack.c.l.b16 %v642
          %v682 = vunpack.c.l.b16 %v643
          %v683 = vunpack.c.l.b16 %v644
          %v684 = vunpack.c.l.b16 %v645
          %v685 = vunpack.c.l.b16 %v646
          %v686 = vunpack.c.l.b16 %v647
          %v687 = vunpack.c.l.b16 %v648
          %v688 = vunpack.c.l.b16 %v649
          %v689 = vpack.c.b16 %v674, %v673
          %v690 = vpack.c.b16 %v676, %v675
          %v691 = vpack.c.b16 %v678, %v677
          %v692 = vpack.c.b16 %v680, %v679
          %v693 = vpack.c.b16 %v682, %v681
          %v694 = vpack.c.b16 %v684, %v683
          %v695 = vpack.c.b16 %v686, %v685
          %v696 = vpack.c.b16 %v688, %v687
          %705 = vmatprep.subr.bf16.mxu0 0
          %706 = vmatpush1.bf16.msra.mxu0 %v689
          %707 = vmatprep.subr.bf16.mxu0 0
          %708 = vmatpush1.bf16.msra.mxu0 %v690
          %709 = vmatprep.subr.bf16.mxu0 0
          %710 = vmatpush1.bf16.msra.mxu0 %v691
          %711 = vmatprep.subr.bf16.mxu0 0
          %712 = vmatpush1.bf16.msra.mxu0 %v692
          %713 = vmatprep.subr.bf16.mxu0 0
          %714 = vmatpush1.bf16.msra.mxu0 %v693
          %715 = vmatprep.subr.bf16.mxu0 0
          %716 = vmatpush1.bf16.msra.mxu0 %v694
          %717 = vmatprep.subr.bf16.mxu0 0
          %718 = vmatpush1.bf16.msra.mxu0 %v695
          %719 = vmatprep.subr.bf16.mxu0 0
          %720 = vmatpush1.bf16.msra.mxu0 %v696
          %721 = vmatprep.subr.bf16.mxu0 0
          %722 = vmatpush1.bf16.msra.mxu0 0
          %723 = vmatprep.subr.bf16.mxu0 0
          %724 = vmatpush1.bf16.msra.mxu0 0
          %725 = vmatprep.subr.bf16.mxu0 0
          %726 = vmatpush1.bf16.msra.mxu0 0
          %727 = vmatprep.subr.bf16.mxu0 0
          %728 = vmatpush1.bf16.msra.mxu0 0
          %729 = vmatprep.subr.bf16.mxu0 0
          %730 = vmatpush1.bf16.msra.mxu0 0
          %731 = vmatprep.subr.bf16.mxu0 0
          %732 = vmatpush1.bf16.msra.mxu0 0
          %733 = vmatprep.subr.bf16.mxu0 0
          %734 = vmatpush1.bf16.msra.mxu0 0
          %735 = vmatprep.subr.bf16.mxu0 0
          %736 = vmatpush1.bf16.msra.mxu0 0
          %737 = vmatprep.mubr.bf16.mxu0 0
          %738 = vmatmul.mubr.bf16.gmra.mrb[0].mxu0 %v633
          %v739 = vpop.f32.mrb[0].mxu0
          %v740 = vadd.f32 %v655, %v739
          %v741 = vpop.f32.mrb[0].mxu0
          %v742 = vpop.f32.mrb[0].mxu0
          %v743 = vpop.f32.mrb[0].mxu0
          %744 = vdwg.mxu0
          %745 = vst [vmem:[%s310] sm:$0x3] %v740
        $region60: #{tpu_custom_call.1} parent=39 // pred_fallthru
          _
        %s746 = sand.u32 %s162, 1
        %s747 = scalar_lea.sflag [#allocation5], %s746
        %s748 = sand.u32 %s162, 1
        %s749 = smul.addr %s748, 2
        %s750 = scalar_lea.vmem [#allocation9], %s749
        // Predicated region
        $region61: #{tpu_custom_call.1} parent=39 // pred_check
          %p751 = pneg %p172
        $region62: #{tpu_custom_call.1} parent=39 // pred_check_branch
          %753 = sbr.rel (%p751) target = $region64
        $region63: #{tpu_custom_call.1} parent=39 // pred_region
          %s755 = ssub.s32 32, 32
          %756 = vsyncadd %s747, %s755
          %s757 = smul.addr %s29, 32
          %s758 = scalar_lea.hbm %s5, %s757
          %s760 = sshll.u32 %s750, 4
          %s761 = int_to_ptr.vmem [resolvable:$true] %s760
          %763 = dma.vmem_to_hbm [thread:$0]  %s761, 32, %s758, %s747
        $region64: #{tpu_custom_call.1} parent=39 // pred_fallthru
          _
      $region40: #{tpu_custom_call.1} parent=5 // pred_fallthru
        _
      %p764 = scmp.le.s32.totalorder 2, %s20
      // Predicated region
      $region65: #{tpu_custom_call.1} parent=5 // pred_check
        %p765 = pneg %p764
      $region66: #{tpu_custom_call.1} parent=5 // pred_check_branch
        %767 = sbr.rel (%p765) target = $region68
      $region67: #{tpu_custom_call.1} parent=5 // pred_region
        %s768 = ssub.s32 %s20, 2
        // Predicated region
        $region69: #{tpu_custom_call.1} parent=67 // pred_check
          %p769 = pneg %p178
        $region70: #{tpu_custom_call.1} parent=67 // pred_check_branch
          %771 = sbr.rel (%p769) target = $region72
        $region71: #{tpu_custom_call.1} parent=67 // pred_region
          %s772 = sand.u32 %s163, 1
          %s773 = scalar_lea.sflag [#allocation5], %s772
          %s774 = sand.u32 %s163, 1
          %s775 = smul.addr %s774, 2
          %s776 = scalar_lea.vmem [#allocation9], %s775
          %777 = dma.done %s773, 32
        $region72: #{tpu_custom_call.1} parent=67 // pred_fallthru
          _
      $region68: #{tpu_custom_call.1} parent=5 // pred_fallthru
        _
    $region6: #{tpu_custom_call.1} parent=1 // loop_footer
      %s24 = sadd.s32 1, %s20
    $region7: #{tpu_custom_call.1} parent=1 // loop_footer_branch
      %19 = sbr.rel target = $region3
    $region8: #{tpu_custom_call.1} parent=1 // loop_exit
      _
    %778 = vsyncpa [#allocation4], 1
    %s779 = scalar_lea.sflag [#allocation4], 1
    %780 = vsyncpa %s779, 1
    %781 = vsyncpa [#allocation7], 1
    %s782 = scalar_lea.sflag [#allocation7], 1
    %783 = vsyncpa %s782, 1
    %784 = vsyncpa [#allocation5], 1
    %s785 = scalar_lea.sflag [#allocation5], 1
    %786 = vsyncpa %s785, 1

</llo_original>
